<compile_context>
chip_gen: v5e
topology: v5e:2x2
jax: 0.10.0
libtpu: 0.0.40
codegen_flags: <defaults>
</compile_context>

<pallas_src>
import functools

import jax
import jax.numpy as jnp
import numpy as np
from jax.experimental import pallas as pl
from jax.experimental.pallas import tpu as pltpu

HIDDEN = 128
OUT_PAD = 128                 # pad act_dim -> 128 lanes: full-lane vst, no vst.msk
TILE_MAX = 512                # 512-row tiles ~ roofline; ~0.6 MB double-buffered
MULTI_TILE_MIN_BATCH = 32     # below this, a single tile (pure latency path)


def _round_up(a, m):
    return ((a + m - 1) // m) * m


def _cdiv(a, b):
    return -(-a // b)


def mlp_kernel(x_ref, w1_ref, w23_ref, w4_ref, b_ref, out_ref):
    # x_ref:   (TILE_B, in_dim)  f32
    # w1_ref:  (in_dim, 128)     bf16
    # w23_ref: (2, 128, 128)     bf16   (layers 2 and 3)
    # w4_ref:  (128, 128)        bf16   (zero-padded from act_dim to 128 lanes)
    # b_ref:   (4, 128)          f32    (zero-padded biases, one row per layer)
    # out_ref: (TILE_B, 128)     f32/bf16 (lane-dense, padded logits)
    x = x_ref[...].astype(jnp.bfloat16)

    h = jnp.dot(x, w1_ref[...], preferred_element_type=jnp.float32) + b_ref[0:1, :]
    h = jnp.maximum(h, 0.0)

    h = jnp.dot(h.astype(jnp.bfloat16), w23_ref[0],
                preferred_element_type=jnp.float32) + b_ref[1:2, :]
    h = jnp.maximum(h, 0.0)

    h = jnp.dot(h.astype(jnp.bfloat16), w23_ref[1],
                preferred_element_type=jnp.float32) + b_ref[2:3, :]
    h = jnp.maximum(h, 0.0)

    logits = jnp.dot(h.astype(jnp.bfloat16), w4_ref[...],
                     preferred_element_type=jnp.float32) + b_ref[3:4, :]
    out_ref[...] = logits.astype(out_ref.dtype)


def prepare_params(params):
    """One-time packing of Net parameters for the Pallas kernel.

    Returns (packed_arrays, act_dim). Call once, reuse across forward calls.
    """
    (w1, b1), (w2, b2), (w3, b3), (w4, b4) = params
    in_dim, hidden = w1.shape
    act_dim = w4.shape[1]
    assert hidden == HIDDEN, "module spec fixes hidden width to 128"
    assert act_dim <= OUT_PAD, f"act_dim={act_dim} exceeds padded lane width {OUT_PAD}"

    w1b = jnp.asarray(w1, jnp.bfloat16)
    w23 = jnp.stack([jnp.asarray(w2, jnp.bfloat16), jnp.asarray(w3, jnp.bfloat16)])
    w4p = jnp.zeros((hidden, OUT_PAD), jnp.bfloat16).at[:, :act_dim].set(
        jnp.asarray(w4, jnp.bfloat16))
    b_stack = jnp.zeros((4, OUT_PAD), jnp.float32)
    b_stack = b_stack.at[0, :hidden].set(jnp.asarray(b1, jnp.float32).reshape(-1))
    b_stack = b_stack.at[1, :hidden].set(jnp.asarray(b2, jnp.float32).reshape(-1))
    b_stack = b_stack.at[2, :hidden].set(jnp.asarray(b3, jnp.float32).reshape(-1))
    b_stack = b_stack.at[3, :act_dim].set(jnp.asarray(b4, jnp.float32).reshape(-1))
    return (w1b, w23, w4p, b_stack), act_dim


def _choose_tile(batch):
    """Balanced 8-aligned batch tile; >=2 (even) grid steps once batch >= 32."""
    if batch < MULTI_TILE_MIN_BATCH:
        return _round_up(max(batch, 1), 8)
    num_tiles = max(2, _cdiv(batch, TILE_MAX))
    num_tiles += num_tiles % 2          # even -> both v7x TensorCores busy
    return _round_up(_cdiv(batch, num_tiles), 8)


@functools.partial(jax.jit, static_argnames=("act_dim", "out_dtype"))
def _forward_impl(obs, w1b, w23, w4p, b_stack, *, act_dim, out_dtype):
    batch = obs.shape[0]
    x = obs.reshape(batch, -1).astype(jnp.float32)   # obs.view(batch, -1)
    in_dim = x.shape[1]

    tile_b = _choose_tile(batch)
    padded_b = _round_up(batch, tile_b)
    if padded_b != batch:
        x = jnp.pad(x, ((0, padded_b - batch), (0, 0)))
    grid = (padded_b // tile_b,)

    cost = pl.CostEstimate(
        flops=2 * padded_b * (in_dim * HIDDEN + 2 * HIDDEN * HIDDEN + HIDDEN * OUT_PAD),
        transcendentals=0,
        bytes_accessed=(padded_b * in_dim * 4 + w1b.size * 2 + w23.size * 2
                        + w4p.size * 2 + b_stack.size * 4
                        + padded_b * OUT_PAD * jnp.dtype(out_dtype).itemsize),
    )

    out = pl.pallas_call(
        mlp_kernel,
        out_shape=jax.ShapeDtypeStruct((padded_b, OUT_PAD), out_dtype),
        grid=grid,
        in_specs=[
            pl.BlockSpec((tile_b, in_dim), lambda i: (i, 0)),        # x: tiled over batch
            pl.BlockSpec((in_dim, HIDDEN), lambda i: (0, 0)),        # w1: VMEM-resident
            pl.BlockSpec((2, HIDDEN, HIDDEN), lambda i: (0, 0, 0)),  # w2/w3: resident
            pl.BlockSpec((HIDDEN, OUT_PAD), lambda i: (0, 0)),       # w4 (padded): resident
            pl.BlockSpec((4, OUT_PAD), lambda i: (0, 0)),            # biases: resident
        ],
        out_specs=pl.BlockSpec((tile_b, OUT_PAD), lambda i: (i, 0)),
        compiler_params=pltpu.CompilerParams(
            dimension_semantics=("parallel",)),
        cost_estimate=cost,
    )(x, w1b, w23, w4p, b_stack)

    return out[:batch, :act_dim]


def net_forward(obs, packed_params, state=None, out_dtype=jnp.float32):
    """Pallas equivalent of Net.forward. Returns (logits, state)."""
    arrays, act_dim = packed_params
    logits = _forward_impl(obs, *arrays, act_dim=act_dim, out_dtype=out_dtype)
    return logits, state


def init_params(key, in_dim, hidden, act_dim):
    """Deterministic PyTorch-style (uniform +/- 1/sqrt(fan_in)) initialization."""
    dims = [(in_dim, hidden), (hidden, hidden), (hidden, hidden), (hidden, act_dim)]
    params = []
    for (fan_in, fan_out) in dims:
        key, kw, kb = jax.random.split(key, 3)
        bound = 1.0 / np.sqrt(fan_in)
        w = jax.random.uniform(kw, (fan_in, fan_out), jnp.float32, -bound, bound)
        b = jax.random.uniform(kb, (1, fan_out), jnp.float32, -bound, bound)
        params.append((w, b))
    return params


def _ref_forward_f32(obs, params):
    """Pure-f32 reference matching the PyTorch Net (per correctness review)."""
    h = obs.reshape(obs.shape[0], -1).astype(jnp.float32)
    for i, (w, b) in enumerate(params):
        h = jnp.dot(h, w) + b.reshape(1, -1)
        if i < 3:
            h = jnp.maximum(h, 0.0)
    return h


if __name__ == "__main__":
    # Small shapes consistent with the module: flat observation vector -> action logits.
    state_dim = 32     # prod(state_shape)
    action_dim = 8     # number of discrete actions

    key = jax.random.PRNGKey(0)
    key, k_obs_small, k_obs_big = jax.random.split(key, 3)
    params = init_params(key, state_dim, HIDDEN, action_dim)
    packed = prepare_params(params)   # one-time weight packing (hoisted per review)

    # Latency path: batch=2 (single tile, grid=(1,))
    obs_small = jax.random.normal(k_obs_small, (2, state_dim), dtype=jnp.float32)
    logits_small, state = net_forward(obs_small, packed)
    logits_small = jax.block_until_ready(logits_small)
    assert logits_small.shape == (2, action_dim)
    np.testing.assert_allclose(np.asarray(logits_small),
                               np.asarray(_ref_forward_f32(obs_small, params)),
                               rtol=5e-2, atol=5e-2)

    # Throughput path: batch=40 exercises the multi-tile grid (>=2 parallel steps).
    obs_big = jax.random.normal(k_obs_big, (40, state_dim), dtype=jnp.float32)
    logits_big, _ = net_forward(obs_big, packed)
    logits_big = jax.block_until_ready(logits_big)
    assert logits_big.shape == (40, action_dim)
    np.testing.assert_allclose(np.asarray(logits_big),
                               np.asarray(_ref_forward_f32(obs_big, params)),
                               rtol=5e-2, atol=5e-2)

    print("KERNEL_OK")
</pallas_src>

<mosaic_0001>
module attributes {stable_mosaic.version = 11 : i64} {
  func.func @mlp_kernel(%arg0: i32, %arg1: memref<8x32xf32, #tpu.memory_space<vmem>>, %arg2: memref<32x128xbf16, #tpu.memory_space<vmem>>, %arg3: memref<2x128x128xbf16, #tpu.memory_space<vmem>>, %arg4: memref<128x128xbf16, #tpu.memory_space<vmem>>, %arg5: memref<4x128xf32, #tpu.memory_space<vmem>>, %arg6: memref<8x128xf32, #tpu.memory_space<vmem>>) attributes {dimension_semantics = [#tpu.dimension_semantics<parallel>], iteration_bounds = array<i64: 1>, scalar_prefetch = 0 : i64, scratch_operands = 0 : i64, tpu.core_type = #tpu.core_type<tc>, window_params = [{transform_indices = @transform_0, window_bounds = array<i64: 8, 32>}, {pipeline_mode = #tpu.pipeline_mode<synchronous>, transform_indices = @transform_1, window_bounds = array<i64: 32, 128>}, {pipeline_mode = #tpu.pipeline_mode<synchronous>, transform_indices = @transform_2, window_bounds = array<i64: 2, 128, 128>}, {pipeline_mode = #tpu.pipeline_mode<synchronous>, transform_indices = @transform_3, window_bounds = array<i64: 128, 128>}, {pipeline_mode = #tpu.pipeline_mode<synchronous>, transform_indices = @transform_4, window_bounds = array<i64: 4, 128>}, {transform_indices = @transform_5, window_bounds = array<i64: 8, 128>}]} {
    %c0 = arith.constant 0 : index
    %c0_0 = arith.constant 0 : index
    %0 = vector.load %arg1[%c0, %c0_0] : memref<8x32xf32, #tpu.memory_space<vmem>>, vector<8x32xf32>
    %1 = arith.truncf %0 : vector<8x32xf32> to vector<8x32xbf16>
    %c0_1 = arith.constant 0 : index
    %c0_2 = arith.constant 0 : index
    %2 = vector.load %arg2[%c0_1, %c0_2] : memref<32x128xbf16, #tpu.memory_space<vmem>>, vector<32x128xbf16>
    %cst = arith.constant dense<0.000000e+00> : vector<8x128xf32>
    %3 = tpu.matmul %1, %2, %cst {dimension_numbers = #tpu.dot_dimension_numbers<[1], [0], [0], [1], [0, 0, 1, 1], [], []>} : vector<8x32xbf16>, vector<32x128xbf16>, vector<8x128xf32> -> vector<8x128xf32>
    %c0_3 = arith.constant 0 : index
    %c0_4 = arith.constant 0 : index
    %4 = vector.load %arg5[%c0_3, %c0_4] : memref<4x128xf32, #tpu.memory_space<vmem>>, vector<1x128xf32>
    %5 = vector.broadcast %4 : vector<1x128xf32> to vector<8x128xf32>
    %6 = arith.addf %3, %5 : vector<8x128xf32>
    %cst_5 = arith.constant 0.000000e+00 : f32
    %7 = vector.broadcast %cst_5 : f32 to vector<8x128xf32>
    %8 = arith.maximumf %6, %7 : vector<8x128xf32>
    %9 = arith.truncf %8 : vector<8x128xf32> to vector<8x128xbf16>
    %c0_6 = arith.constant 0 : index
    %c0_7 = arith.constant 0 : index
    %c0_8 = arith.constant 0 : index
    %10 = vector.load %arg3[%c0_6, %c0_7, %c0_8] : memref<2x128x128xbf16, #tpu.memory_space<vmem>>, vector<1x128x128xbf16>
    %11 = vector.shape_cast %10 : vector<1x128x128xbf16> to vector<128x128xbf16>
    %cst_9 = arith.constant dense<0.000000e+00> : vector<8x128xf32>
    %12 = tpu.matmul %9, %11, %cst_9 {dimension_numbers = #tpu.dot_dimension_numbers<[1], [0], [0], [1], [0, 0, 1, 1], [], []>} : vector<8x128xbf16>, vector<128x128xbf16>, vector<8x128xf32> -> vector<8x128xf32>
    %c1 = arith.constant 1 : index
    %c0_10 = arith.constant 0 : index
    %13 = vector.load %arg5[%c1, %c0_10] : memref<4x128xf32, #tpu.memory_space<vmem>>, vector<1x128xf32>
    %14 = vector.broadcast %13 : vector<1x128xf32> to vector<8x128xf32>
    %15 = arith.addf %12, %14 : vector<8x128xf32>
    %cst_11 = arith.constant 0.000000e+00 : f32
    %16 = vector.broadcast %cst_11 : f32 to vector<8x128xf32>
    %17 = arith.maximumf %15, %16 : vector<8x128xf32>
    %18 = arith.truncf %17 : vector<8x128xf32> to vector<8x128xbf16>
    %c1_12 = arith.constant 1 : index
    %c0_13 = arith.constant 0 : index
    %c0_14 = arith.constant 0 : index
    %19 = vector.load %arg3[%c1_12, %c0_13, %c0_14] : memref<2x128x128xbf16, #tpu.memory_space<vmem>>, vector<1x128x128xbf16>
    %20 = vector.shape_cast %19 : vector<1x128x128xbf16> to vector<128x128xbf16>
    %cst_15 = arith.constant dense<0.000000e+00> : vector<8x128xf32>
    %21 = tpu.matmul %18, %20, %cst_15 {dimension_numbers = #tpu.dot_dimension_numbers<[1], [0], [0], [1], [0, 0, 1, 1], [], []>} : vector<8x128xbf16>, vector<128x128xbf16>, vector<8x128xf32> -> vector<8x128xf32>
    %c2 = arith.constant 2 : index
    %c0_16 = arith.constant 0 : index
    %22 = vector.load %arg5[%c2, %c0_16] : memref<4x128xf32, #tpu.memory_space<vmem>>, vector<1x128xf32>
    %23 = vector.broadcast %22 : vector<1x128xf32> to vector<8x128xf32>
    %24 = arith.addf %21, %23 : vector<8x128xf32>
    %cst_17 = arith.constant 0.000000e+00 : f32
    %25 = vector.broadcast %cst_17 : f32 to vector<8x128xf32>
    %26 = arith.maximumf %24, %25 : vector<8x128xf32>
    %27 = arith.truncf %26 : vector<8x128xf32> to vector<8x128xbf16>
    %c0_18 = arith.constant 0 : index
    %c0_19 = arith.constant 0 : index
    %28 = vector.load %arg4[%c0_18, %c0_19] : memref<128x128xbf16, #tpu.memory_space<vmem>>, vector<128x128xbf16>
    %cst_20 = arith.constant dense<0.000000e+00> : vector<8x128xf32>
    %29 = tpu.matmul %27, %28, %cst_20 {dimension_numbers = #tpu.dot_dimension_numbers<[1], [0], [0], [1], [0, 0, 1, 1], [], []>} : vector<8x128xbf16>, vector<128x128xbf16>, vector<8x128xf32> -> vector<8x128xf32>
    %c3 = arith.constant 3 : index
    %c0_21 = arith.constant 0 : index
    %30 = vector.load %arg5[%c3, %c0_21] : memref<4x128xf32, #tpu.memory_space<vmem>>, vector<1x128xf32>
    %31 = vector.broadcast %30 : vector<1x128xf32> to vector<8x128xf32>
    %32 = arith.addf %29, %31 : vector<8x128xf32>
    %c0_22 = arith.constant 0 : index
    %c0_23 = arith.constant 0 : index
    %33 = vector.load %arg6[%c0_22, %c0_23] : memref<8x128xf32, #tpu.memory_space<vmem>>, vector<8x128xf32>
    tpu.vector_store %arg6[%c0_22, %c0_23], %32 {strides = array<i32>} : memref<8x128xf32, #tpu.memory_space<vmem>>, vector<8x128xf32>,
    return
  }
  func.func @transform_0(%arg0: i32) -> (i32, i32) {
    %c0_i32 = arith.constant 0 : i32
    %c0_i32_0 = arith.constant 0 : i32
    return %arg0, %c0_i32 : i32, i32
  }
  func.func @transform_1(%arg0: i32) -> (i32, i32) {
    %c0_i32 = arith.constant 0 : i32
    %c0_i32_0 = arith.constant 0 : i32
    %c0_i32_1 = arith.constant 0 : i32
    return %c0_i32, %c0_i32_0 : i32, i32
  }
  func.func @transform_2(%arg0: i32) -> (i32, i32, i32) {
    %c0_i32 = arith.constant 0 : i32
    %c0_i32_0 = arith.constant 0 : i32
    %c0_i32_1 = arith.constant 0 : i32
    %c0_i32_2 = arith.constant 0 : i32
    return %c0_i32, %c0_i32_0, %c0_i32_1 : i32, i32, i32
  }
  func.func @transform_3(%arg0: i32) -> (i32, i32) {
    %c0_i32 = arith.constant 0 : i32
    %c0_i32_0 = arith.constant 0 : i32
    %c0_i32_1 = arith.constant 0 : i32
    return %c0_i32, %c0_i32_0 : i32, i32
  }
  func.func @transform_4(%arg0: i32) -> (i32, i32) {
    %c0_i32 = arith.constant 0 : i32
    %c0_i32_0 = arith.constant 0 : i32
    %c0_i32_1 = arith.constant 0 : i32
    return %c0_i32, %c0_i32_0 : i32, i32
  }
  func.func @transform_5(%arg0: i32) -> (i32, i32) {
    %c0_i32 = arith.constant 0 : i32
    %c0_i32_0 = arith.constant 0 : i32
    return %arg0, %c0_i32 : i32, i32
  }
}

</mosaic_0001>

<llo_original>
// kernel: _forward_impl.1
$region0: #{_forward_impl.1}
  #allocation0 [shape = 'u32[]', space=smem, size = 0x4, offset = 0x4, fixed_abs, tag = 'smem constant byte address 0x4 - core index']
  #allocation1 [shape = 'u32[72,128]{1,0:T(1,128)}', space=vmem, size = 0x9000, scoped, tag = 'internal scratch']
  %s0 = inlined_call_operand.vmem [shape: f32[8,32], index: 0, kind: input, shape index: {}]
  %s1 = inlined_call_operand.hbm [shape: bf16[32,128], index: 1, kind: input, shape index: {}]
  %s2 = inlined_call_operand.hbm [shape: bf16[2,128,128], index: 2, kind: input, shape index: {}]
  %s3 = inlined_call_operand.hbm [shape: bf16[128,128], index: 3, kind: input, shape index: {}]
  %s4 = inlined_call_operand.vmem [shape: f32[4,128], index: 4, kind: input, shape index: {}]
  %s5 = inlined_call_operand.vmem [shape: f32[8,128], index: 5, kind: output, shape index: {}]
  %s6 = sld [smem:[#allocation0]]
  $region42: #{_forward_impl.1} parent=0
    _
  %s8 = ssub.s32 1, %s6
  %s9 = scalar_select 0, %s8, %s6
  $region1: #{_forward_impl.1} parent=0
    #allocation2 [shape = 'u8[8192]{0}', space=vmem, size = 0x2000, scoped, tag = 'input window, operand 1, single buffered']
    #allocation3 [shape = 's32[1]{0}', space=sflag, size = 0x4, scoped, tag = 'scoped memory for _forward_impl.1']
    #allocation4 [shape = 'u8[65536]{0}', space=vmem, size = 0x10000, scoped, tag = 'input window, operand 2, single buffered']
    #allocation5 [shape = 's32[1]{0}', space=sflag, size = 0x4, scoped, tag = 'scoped memory for _forward_impl.1']
    #allocation6 [shape = 'u8[32768]{0}', space=vmem, size = 0x8000, scoped, tag = 'input window, operand 3, single buffered']
    %10 = vsyncpa [#allocation3], 0
    %11 = vsyncpa [#allocation5], 0
    // Predicated region
    $region2: #{_forward_impl.1} parent=1 // pred_check
      _
    $region3: #{_forward_impl.1} parent=1 // pred_check_branch
      %13 = sbr.rel (0) target = $region5
    $region4: #{_forward_impl.1} parent=1 // pred_region
      _
    $region5: #{_forward_impl.1} parent=1 // pred_fallthru
      _
    // Predicated region
    $region6: #{_forward_impl.1} parent=1 // pred_check
      _
    $region7: #{_forward_impl.1} parent=1 // pred_check_branch
      %15 = sbr.rel (0) target = $region9
    $region8: #{_forward_impl.1} parent=1 // pred_region
      %17 = vsyncadd [#allocation3], 0
      %s18 = sshll.u32 %s1, 4
      %s19 = int_to_ptr.hbm [resolvable:$true] %s18
      %s20 = sshll.u32 [#allocation2], 4
      %s21 = int_to_ptr.vmem [resolvable:$true] %s20
      %26 = dma.hbm_to_vmem [thread:$0]  %s19, 256, %s21, [#allocation3], 64, 64, 4
    $region9: #{_forward_impl.1} parent=1 // pred_fallthru
      _
    // Predicated region
    $region10: #{_forward_impl.1} parent=1 // pred_check
      _
    $region11: #{_forward_impl.1} parent=1 // pred_check_branch
      %28 = sbr.rel (0) target = $region13
    $region12: #{_forward_impl.1} parent=1 // pred_region
      %30 = vsyncadd [#allocation5], 0
      %s31 = sshll.u32 %s2, 4
      %s32 = int_to_ptr.hbm [resolvable:$true] %s31
      %s33 = sshll.u32 [#allocation4], 4
      %s34 = int_to_ptr.vmem [resolvable:$true] %s33
      %39 = dma.hbm_to_vmem [thread:$0]  %s32, 2048, %s34, [#allocation5], 64, 64, 4
    $region13: #{_forward_impl.1} parent=1 // pred_fallthru
      _
    // Predicated region
    $region14: #{_forward_impl.1} parent=1 // pred_check
      _
    $region15: #{_forward_impl.1} parent=1 // pred_check_branch
      %41 = sbr.rel (0) target = $region17
    $region16: #{_forward_impl.1} parent=1 // pred_region
      %43 = vsyncadd [#allocation5], 0
      %s44 = sshll.u32 %s3, 4
      %s45 = int_to_ptr.hbm [resolvable:$true] %s44
      %s46 = sshll.u32 [#allocation6], 4
      %s47 = int_to_ptr.vmem [resolvable:$true] %s46
      %52 = dma.hbm_to_vmem [thread:$0]  %s45, 1024, %s47, [#allocation5], 64, 64, 4
    $region17: #{_forward_impl.1} parent=1 // pred_fallthru
      _
    // Predicated region
    $region18: #{_forward_impl.1} parent=1 // pred_check
      _
    $region19: #{_forward_impl.1} parent=1 // pred_check_branch
      %54 = sbr.rel (0) target = $region21
    $region20: #{_forward_impl.1} parent=1 // pred_region
      _
    $region21: #{_forward_impl.1} parent=1 // pred_fallthru
      _
    // Predicated region
    $region22: #{_forward_impl.1} parent=1 // pred_check
      _
    $region23: #{_forward_impl.1} parent=1 // pred_check_branch
      %56 = sbr.rel (0) target = $region25
    $region24: #{_forward_impl.1} parent=1 // pred_region
      %58 = dma.done [#allocation3], 256
    $region25: #{_forward_impl.1} parent=1 // pred_fallthru
      _
    // Predicated region
    $region26: #{_forward_impl.1} parent=1 // pred_check
      _
    $region27: #{_forward_impl.1} parent=1 // pred_check_branch
      %60 = sbr.rel (0) target = $region29
    $region28: #{_forward_impl.1} parent=1 // pred_region
      %62 = dma.done [#allocation5], 2048
    $region29: #{_forward_impl.1} parent=1 // pred_fallthru
      _
    // Predicated region
    $region30: #{_forward_impl.1} parent=1 // pred_check
      _
    $region31: #{_forward_impl.1} parent=1 // pred_check_branch
      %64 = sbr.rel (0) target = $region33
    $region32: #{_forward_impl.1} parent=1 // pred_region
      %66 = dma.done [#allocation5], 1024
    $region33: #{_forward_impl.1} parent=1 // pred_fallthru
      _
    %v68 = vld [vmem:[%s0] sm:$0xff]
    %v69 = vpack.c.bf16 %v68, %v68
    %v70 = vld [vmem:[#allocation2] sm:$0xf]
    %v71 = vld [vmem:[#allocation2 + $0x4] sm:$0xf]
    %v72 = vld [vmem:[#allocation2 + $0x8] sm:$0xf]
    %v73 = vld [vmem:[#allocation2 + $0xc] sm:$0xf]
    %v74 = vld [vmem:[%s4] sm:$0x1]
    %v75 = vperm.slane %v74, 0
    %v80 = vunpack.c.l.b16 %v70
    %v81 = vunpack.c.l.b16 %v71
    %v82 = vunpack.c.l.b16 %v72
    %v83 = vunpack.c.l.b16 %v73
    %v84 = vpack.c.b16 %v81, %v80
    %v85 = vpack.c.b16 %v83, %v82
    %vm88 = vcmask 261120
    %v90 = vsel %vm88, %v69, 0
    %92 = vmatpush.bf16.msra.mxu0 0
    %93 = vmatpush.bf16.msra.mxu0 0
    %94 = vmatpush.bf16.msra.mxu0 0
    %95 = vmatpush.bf16.msra.mxu0 0
    %96 = vmatpush.bf16.msra.mxu0 0
    %97 = vmatpush.bf16.msra.mxu0 0
    %98 = vmatpush.bf16.msra.mxu0 %v85
    %99 = vmatpush.bf16.msra.mxu0 %v84
    %100 = vmatmul.bf16.gmra.mxu0 %v90
    %v101 = vpop.f32.mrf.mxu0
    %v102 = vadd.f32 %v75, %v101
    %v103 = vpop.f32.mrf.mxu0
    %104 = vdwg.mxu0
    %v105 = vmax.f32 %v102, 0.0
    %v106 = vpack.c.bf16 %v105, %v105
    %v107 = vld [vmem:[#allocation4] sm:$0xf]
    %v108 = vld [vmem:[#allocation4 + $0x4] sm:$0xf]
    %v109 = vld [vmem:[#allocation4 + $0x8] sm:$0xf]
    %v110 = vld [vmem:[#allocation4 + $0xc] sm:$0xf]
    %v111 = vld [vmem:[#allocation4 + $0x10] sm:$0xf]
    %v112 = vld [vmem:[#allocation4 + $0x14] sm:$0xf]
    %v113 = vld [vmem:[#allocation4 + $0x18] sm:$0xf]
    %v114 = vld [vmem:[#allocation4 + $0x1c] sm:$0xf]
    %v115 = vld [vmem:[#allocation4 + $0x20] sm:$0xf]
    %v116 = vld [vmem:[#allocation4 + $0x24] sm:$0xf]
    %v117 = vld [vmem:[#allocation4 + $0x28] sm:$0xf]
    %v118 = vld [vmem:[#allocation4 + $0x2c] sm:$0xf]
    %v119 = vld [vmem:[#allocation4 + $0x30] sm:$0xf]
    %v120 = vld [vmem:[#allocation4 + $0x34] sm:$0xf]
    %v121 = vld [vmem:[#allocation4 + $0x38] sm:$0xf]
    %v122 = vld [vmem:[#allocation4 + $0x3c] sm:$0xf]
    %v123 = vld [vmem:[%s4 + $0x1] sm:$0x1]
    %v124 = vperm.slane %v123, 0
    %v141 = vunpack.c.l.b16 %v107
    %v142 = vunpack.c.l.b16 %v108
    %v143 = vunpack.c.l.b16 %v109
    %v144 = vunpack.c.l.b16 %v110
    %v145 = vunpack.c.l.b16 %v111
    %v146 = vunpack.c.l.b16 %v112
    %v147 = vunpack.c.l.b16 %v113
    %v148 = vunpack.c.l.b16 %v114
    %v149 = vunpack.c.l.b16 %v115
    %v150 = vunpack.c.l.b16 %v116
    %v151 = vunpack.c.l.b16 %v117
    %v152 = vunpack.c.l.b16 %v118
    %v153 = vunpack.c.l.b16 %v119
    %v154 = vunpack.c.l.b16 %v120
    %v155 = vunpack.c.l.b16 %v121
    %v156 = vunpack.c.l.b16 %v122
    %v157 = vpack.c.b16 %v142, %v141
    %v158 = vpack.c.b16 %v144, %v143
    %v159 = vpack.c.b16 %v146, %v145
    %v160 = vpack.c.b16 %v148, %v147
    %v161 = vpack.c.b16 %v150, %v149
    %v162 = vpack.c.b16 %v152, %v151
    %v163 = vpack.c.b16 %v154, %v153
    %v164 = vpack.c.b16 %v156, %v155
    %173 = vmatpush.bf16.msra.mxu0 %v164
    %174 = vmatpush.bf16.msra.mxu0 %v163
    %175 = vmatpush.bf16.msra.mxu0 %v162
    %176 = vmatpush.bf16.msra.mxu0 %v161
    %177 = vmatpush.bf16.msra.mxu0 %v160
    %178 = vmatpush.bf16.msra.mxu0 %v159
    %179 = vmatpush.bf16.msra.mxu0 %v158
    %180 = vmatpush.bf16.msra.mxu0 %v157
    %181 = vmatmul.bf16.gmra.mxu0 %v106
    %v182 = vpop.f32.mrf.mxu0
    %v183 = vadd.f32 %v124, %v182
    %v184 = vpop.f32.mrf.mxu0
    %185 = vdwg.mxu0
    %v186 = vmax.f32 %v183, 0.0
    %v187 = vpack.c.bf16 %v186, %v186
    %s188 = scalar_lea.vmem [#allocation4], 64
    %v189 = vld [vmem:[%s188] sm:$0xf]
    %v190 = vld [vmem:[%s188 + $0x4] sm:$0xf]
    %v191 = vld [vmem:[%s188 + $0x8] sm:$0xf]
    %v192 = vld [vmem:[%s188 + $0xc] sm:$0xf]
    %v193 = vld [vmem:[%s188 + $0x10] sm:$0xf]
    %v194 = vld [vmem:[%s188 + $0x14] sm:$0xf]
    %v195 = vld [vmem:[%s188 + $0x18] sm:$0xf]
    %v196 = vld [vmem:[%s188 + $0x1c] sm:$0xf]
    %v197 = vld [vmem:[%s188 + $0x20] sm:$0xf]
    %v198 = vld [vmem:[%s188 + $0x24] sm:$0xf]
    %v199 = vld [vmem:[%s188 + $0x28] sm:$0xf]
    %v200 = vld [vmem:[%s188 + $0x2c] sm:$0xf]
    %v201 = vld [vmem:[%s188 + $0x30] sm:$0xf]
    %v202 = vld [vmem:[%s188 + $0x34] sm:$0xf]
    %v203 = vld [vmem:[%s188 + $0x38] sm:$0xf]
    %v204 = vld [vmem:[%s188 + $0x3c] sm:$0xf]
    %v205 = vld [vmem:[%s4 + $0x2] sm:$0x1]
    %v206 = vperm.slane %v205, 0
    %v223 = vunpack.c.l.b16 %v189
    %v224 = vunpack.c.l.b16 %v190
    %v225 = vunpack.c.l.b16 %v191
    %v226 = vunpack.c.l.b16 %v192
    %v227 = vunpack.c.l.b16 %v193
    %v228 = vunpack.c.l.b16 %v194
    %v229 = vunpack.c.l.b16 %v195
    %v230 = vunpack.c.l.b16 %v196
    %v231 = vunpack.c.l.b16 %v197
    %v232 = vunpack.c.l.b16 %v198
    %v233 = vunpack.c.l.b16 %v199
    %v234 = vunpack.c.l.b16 %v200
    %v235 = vunpack.c.l.b16 %v201
    %v236 = vunpack.c.l.b16 %v202
    %v237 = vunpack.c.l.b16 %v203
    %v238 = vunpack.c.l.b16 %v204
    %v239 = vpack.c.b16 %v224, %v223
    %v240 = vpack.c.b16 %v226, %v225
    %v241 = vpack.c.b16 %v228, %v227
    %v242 = vpack.c.b16 %v230, %v229
    %v243 = vpack.c.b16 %v232, %v231
    %v244 = vpack.c.b16 %v234, %v233
    %v245 = vpack.c.b16 %v236, %v235
    %v246 = vpack.c.b16 %v238, %v237
    %255 = vmatpush.bf16.msra.mxu0 %v246
    %256 = vmatpush.bf16.msra.mxu0 %v245
    %257 = vmatpush.bf16.msra.mxu0 %v244
    %258 = vmatpush.bf16.msra.mxu0 %v243
    %259 = vmatpush.bf16.msra.mxu0 %v242
    %260 = vmatpush.bf16.msra.mxu0 %v241
    %261 = vmatpush.bf16.msra.mxu0 %v240
    %262 = vmatpush.bf16.msra.mxu0 %v239
    %263 = vmatmul.bf16.gmra.mxu0 %v187
    %v264 = vpop.f32.mrf.mxu0
    %v265 = vadd.f32 %v206, %v264
    %v266 = vpop.f32.mrf.mxu0
    %267 = vdwg.mxu0
    %v268 = vmax.f32 %v265, 0.0
    %v269 = vpack.c.bf16 %v268, %v268
    %v270 = vld [vmem:[#allocation6] sm:$0xf]
    %v271 = vld [vmem:[#allocation6 + $0x4] sm:$0xf]
    %v272 = vld [vmem:[#allocation6 + $0x8] sm:$0xf]
    %v273 = vld [vmem:[#allocation6 + $0xc] sm:$0xf]
    %v274 = vld [vmem:[#allocation6 + $0x10] sm:$0xf]
    %v275 = vld [vmem:[#allocation6 + $0x14] sm:$0xf]
    %v276 = vld [vmem:[#allocation6 + $0x18] sm:$0xf]
    %v277 = vld [vmem:[#allocation6 + $0x1c] sm:$0xf]
    %v278 = vld [vmem:[#allocation6 + $0x20] sm:$0xf]
    %v279 = vld [vmem:[#allocation6 + $0x24] sm:$0xf]
    %v280 = vld [vmem:[#allocation6 + $0x28] sm:$0xf]
    %v281 = vld [vmem:[#allocation6 + $0x2c] sm:$0xf]
    %v282 = vld [vmem:[#allocation6 + $0x30] sm:$0xf]
    %v283 = vld [vmem:[#allocation6 + $0x34] sm:$0xf]
    %v284 = vld [vmem:[#allocation6 + $0x38] sm:$0xf]
    %v285 = vld [vmem:[#allocation6 + $0x3c] sm:$0xf]
    %v286 = vld [vmem:[%s4 + $0x3] sm:$0x1]
    %v287 = vperm.slane %v286, 0
    %v304 = vunpack.c.l.b16 %v270
    %v305 = vunpack.c.l.b16 %v271
    %v306 = vunpack.c.l.b16 %v272
    %v307 = vunpack.c.l.b16 %v273
    %v308 = vunpack.c.l.b16 %v274
    %v309 = vunpack.c.l.b16 %v275
    %v310 = vunpack.c.l.b16 %v276
    %v311 = vunpack.c.l.b16 %v277
    %v312 = vunpack.c.l.b16 %v278
    %v313 = vunpack.c.l.b16 %v279
    %v314 = vunpack.c.l.b16 %v280
    %v315 = vunpack.c.l.b16 %v281
    %v316 = vunpack.c.l.b16 %v282
    %v317 = vunpack.c.l.b16 %v283
    %v318 = vunpack.c.l.b16 %v284
    %v319 = vunpack.c.l.b16 %v285
    %v320 = vpack.c.b16 %v305, %v304
    %v321 = vpack.c.b16 %v307, %v306
    %v322 = vpack.c.b16 %v309, %v308
    %v323 = vpack.c.b16 %v311, %v310
    %v324 = vpack.c.b16 %v313, %v312
    %v325 = vpack.c.b16 %v315, %v314
    %v326 = vpack.c.b16 %v317, %v316
    %v327 = vpack.c.b16 %v319, %v318
    %336 = vmatpush.bf16.msra.mxu0 %v327
    %337 = vmatpush.bf16.msra.mxu0 %v326
    %338 = vmatpush.bf16.msra.mxu0 %v325
    %339 = vmatpush.bf16.msra.mxu0 %v324
    %340 = vmatpush.bf16.msra.mxu0 %v323
    %341 = vmatpush.bf16.msra.mxu0 %v322
    %342 = vmatpush.bf16.msra.mxu0 %v321
    %343 = vmatpush.bf16.msra.mxu0 %v320
    %344 = vmatmul.bf16.gmra.mxu0 %v269
    %v345 = vpop.f32.mrf.mxu0
    %v346 = vadd.f32 %v287, %v345
    %v347 = vpop.f32.mrf.mxu0
    %348 = vdwg.mxu0
    %349 = vst [vmem:[%s5] sm:$0xff] %v346
    // Predicated region
    $region34: #{_forward_impl.1} parent=1 // pred_check
      _
    $region35: #{_forward_impl.1} parent=1 // pred_check_branch
      %351 = sbr.rel (0) target = $region37
    $region36: #{_forward_impl.1} parent=1 // pred_region
      _
    $region37: #{_forward_impl.1} parent=1 // pred_fallthru
      _
    // Predicated region
    $region38: #{_forward_impl.1} parent=1 // pred_check
      _
    $region39: #{_forward_impl.1} parent=1 // pred_check_branch
      %353 = sbr.rel (0) target = $region41
    $region40: #{_forward_impl.1} parent=1 // pred_region
      _
    $region41: #{_forward_impl.1} parent=1 // pred_fallthru
      _
    %354 = vsyncpa [#allocation3], 1
    %355 = vsyncpa [#allocation5], 1

</llo_original>
